<compile_context>
chip_gen: v7x
topology: tpu7x:2x2x1
jax: 0.10.0
libtpu: 0.0.40
codegen_flags: <defaults>
</compile_context>

<pallas_src>
import jax
import jax.numpy as jnp
from jax.experimental import pallas as pl
from jax.experimental.pallas import tpu as pltpu


def _round_up(x, m):
    return ((x + m - 1) // m) * m


def _dense_layer_kernel(x_ref, w1_ref, w2_ref, o_ref, h_scr):
    # x_ref : (1, 1, Lt + K - 1, Cin)  bf16  halo'd input tile (channels-last)
    # w1_ref: (Cin, Cmid)              bf16  1x1 conv weight (pre-transposed)
    # w2_ref: (K*Cmid, Cpad)           bf16  k=7 conv weight, tap-major rows, lane-padded
    # o_ref : (1, Lt, Cpad)            out dtype (lane-dense: Cpad = 128*ceil)
    # h_scr : (Lt + K - 1, Cmid) f32   VMEM scratch for the bottleneck activation
    lt = o_ref.shape[1]
    n_taps = h_scr.shape[0] - lt + 1                           # K (= 7)
    compute_dtype = w2_ref.dtype

    # Bottleneck: kernel_size=1 conv == channel matmul (bf16 MXU, f32 acc) + ReLU.
    x = x_ref[0, 0]                                            # (Lt+K-1, Cin)
    h = jnp.dot(x, w1_ref[...], preferred_element_type=jnp.float32)
    h_scr[...] = jnp.maximum(h, 0.0)                           # staged once in VMEM

    # k=7 conv, stride=1, as ONE im2col matmul: concatenate the 7 sublane-shifted
    # views of the scratch along channels -> (Lt, 7*Cmid), contract against the
    # tap-major flattened weight (7*Cmid, Cpad).  Halo rows carry real neighbour
    # data (internal tiles) or zeros (true sequence ends), so boundary semantics
    # match Conv1d(padding=3).
    h_cat = jnp.concatenate(
        [h_scr[pl.ds(k, lt), :].astype(compute_dtype) for k in range(n_taps)],
        axis=-1)                                               # (Lt, K*Cmid) bf16
    out = jnp.dot(h_cat, w2_ref[...], preferred_element_type=jnp.float32)

    o_ref[0] = jnp.maximum(out, 0.0).astype(o_ref.dtype)       # lane-dense store


def dense_layer_forward(inputs, w1_torch, w2_torch, drop_rate=0.0, training=False,
                        dropout_key=None, *, lt=512, compute_dtype=jnp.bfloat16):
    """inputs: (N, C, L) array or list of such (concatenated on C). Torch weight shapes."""
    if isinstance(inputs, (list, tuple)):
        x_ncl = jnp.concatenate(list(inputs), axis=1)
    else:
        x_ncl = inputs

    N, Cin, L = x_ncl.shape
    Cmid = w1_torch.shape[0]           # bn_size * growth_rate
    Cout, _, K = w2_torch.shape        # growth_rate, Cmid, 7
    pad = (K - 1) // 2                 # 3
    out_dtype = x_ncl.dtype

    # L tile: multiple of 8 sublanes, capped by the (rounded-up) sequence length.
    # lt ~ 512 is sized for v7x's 32 MiB scoped VMEM; v5e/v6e can afford 1024+.
    lt = max(8, min(_round_up(lt, 8), _round_up(L, 8)))
    n_tiles = pl.cdiv(L, lt)
    l_round = n_tiles * lt
    cpad = _round_up(Cout, 128)        # lane-dense output width

    # ---- glue: layout plumbing (channels-last, halo'd tiles, weight transposes) ----
    x_nlc = jnp.transpose(x_ncl, (0, 2, 1)).astype(compute_dtype)        # (N, L, Cin)
    # zero halo at the true sequence ends + right padding up to a whole tile.
    x_zp = jnp.pad(x_nlc, ((0, 0), (pad, pad + l_round - L), (0, 0)))
    # overlapping (halo'd) L tiles: (N, T, lt + K - 1, Cin). Internal tile edges see
    # real neighbour rows; only the outer sequence edges see zeros.
    x_tiles = jnp.stack(
        [x_zp[:, t * lt: t * lt + lt + 2 * pad, :] for t in range(n_tiles)], axis=1)

    w1 = jnp.transpose(w1_torch[:, :, 0], (1, 0)).astype(compute_dtype)  # (Cin, Cmid)
    # Tap-major im2col weight: w2_cat[k*Cmid + c, o] = w2_torch[o, c, k], lane-padded.
    w2 = jnp.transpose(w2_torch, (2, 1, 0)).reshape(K * Cmid, Cout)      # (K*Cmid, Cout)
    w2 = jnp.pad(w2, ((0, 0), (0, cpad - Cout))).astype(compute_dtype)   # (K*Cmid, Cpad)

    out_padded = pl.pallas_call(
        _dense_layer_kernel,
        out_shape=jax.ShapeDtypeStruct((N, l_round, cpad), out_dtype),
        grid_spec=pltpu.PrefetchScalarGridSpec(
            num_scalar_prefetch=0,
            grid=(N, n_tiles),
            in_specs=[
                pl.BlockSpec((1, 1, lt + 2 * pad, Cin), lambda n, t: (n, t, 0, 0)),
                pl.BlockSpec((Cin, Cmid), lambda n, t: (0, 0)),
                pl.BlockSpec((K * Cmid, cpad), lambda n, t: (0, 0)),
            ],
            out_specs=pl.BlockSpec((1, lt, cpad), lambda n, t: (n, t, 0)),
            scratch_shapes=[pltpu.VMEM((lt + 2 * pad, Cmid), jnp.float32)],
        ),
        compiler_params=pltpu.CompilerParams(
            dimension_semantics=("parallel", "parallel"),
            vmem_limit_bytes=32 * 1024 * 1024,   # explicit; fits v7x scoped VMEM
        ),
    )(x_tiles, w1, w2)

    out_nlc = out_padded[:, :L, :Cout]              # drop L round-up + lane padding
    out_ncl = jnp.transpose(out_nlc, (0, 2, 1))     # back to (N, C, L)

    if drop_rate > 0.0 and training:
        # Glue: inverted dropout (RNG stream differs from torch, semantics match).
        keep = 1.0 - drop_rate
        mask = jax.random.bernoulli(dropout_key, keep, out_ncl.shape)
        out_ncl = jnp.where(mask, out_ncl / keep, 0.0).astype(out_ncl.dtype)

    return out_ncl


def _reference_forward(inputs, w1_torch, w2_torch, compute_dtype=jnp.bfloat16):
    # Plain-JAX reference mirroring PyTorch Conv1d (NCL layout), using the same
    # bf16-inputs / f32-accumulation precision policy as the kernel.
    if isinstance(inputs, (list, tuple)):
        x = jnp.concatenate(list(inputs), axis=1)
    else:
        x = inputs
    dn = jax.lax.conv_dimension_numbers(x.shape, w1_torch.shape, ("NCH", "OIH", "NCH"))
    h = jax.lax.conv_general_dilated(
        x.astype(compute_dtype), w1_torch.astype(compute_dtype), (1,), [(0, 0)],
        dimension_numbers=dn, preferred_element_type=jnp.float32)
    h = jnp.maximum(h, 0.0)
    dn2 = jax.lax.conv_dimension_numbers(h.shape, w2_torch.shape, ("NCH", "OIH", "NCH"))
    o = jax.lax.conv_general_dilated(
        h.astype(compute_dtype), w2_torch.astype(compute_dtype), (1,), [(3, 3)],
        dimension_numbers=dn2, preferred_element_type=jnp.float32)
    return jnp.maximum(o, 0.0)


if __name__ == "__main__":
    # Module hyper-parameters (small, consistent with the forward pass).
    num_input_features = 8     # channels after concatenating prev_features
    growth_rate = 8
    bn_size = 4
    drop_rate = 0.0            # TODO(synk): torch F.dropout RNG not reproduced; example uses p=0
    N, L = 2, 40
    Cmid = bn_size * growth_rate    # 32
    Cout = growth_rate              # 8

    key = jax.random.PRNGKey(0)
    k_x1, k_x2, k_w1, k_w2 = jax.random.split(key, 4)

    # DenseNet-style input: list of previous feature maps, concatenated on C.
    x1 = jax.random.normal(k_x1, (N, num_input_features // 2, L), jnp.float32)
    x2 = jax.random.normal(k_x2, (N, num_input_features // 2, L), jnp.float32)
    prev_features = [x1, x2]

    # Deterministic parameter init (kaiming-ish scale), PyTorch weight shapes.
    w1 = jax.random.normal(k_w1, (Cmid, num_input_features, 1), jnp.float32)
    w1 = w1 * (2.0 / num_input_features) ** 0.5
    w2 = jax.random.normal(k_w2, (Cout, Cmid, 7), jnp.float32)
    w2 = w2 * (2.0 / (Cmid * 7)) ** 0.5

    # lt=16 exercises multiple halo'd L tiles plus the L round-up path at toy shapes.
    out = dense_layer_forward(prev_features, w1, w2, drop_rate=drop_rate, lt=16)
    out = jax.block_until_ready(out)

    ref = _reference_forward(prev_features, w1, w2)
    assert out.shape == (N, Cout, L), out.shape
    assert jnp.allclose(out, ref, atol=1e-3, rtol=1e-3), "mismatch vs reference"

    print("KERNEL_OK")
</pallas_src>

<mosaic_0001>
module attributes {stable_mosaic.version = 11 : i64} {
  func.func @_dense_layer_kernel(%arg0: i32, %arg1: i32, %arg2: memref<1x1x22x8xbf16, #tpu.memory_space<vmem>>, %arg3: memref<8x32xbf16, #tpu.memory_space<vmem>>, %arg4: memref<224x128xbf16, #tpu.memory_space<vmem>>, %arg5: memref<1x16x128xf32, #tpu.memory_space<vmem>>, %arg6: memref<22x32xf32, #tpu.memory_space<vmem>>) attributes {dimension_semantics = [#tpu.dimension_semantics<parallel>, #tpu.dimension_semantics<parallel>], iteration_bounds = array<i64: 2, 3>, scalar_prefetch = 0 : i64, scratch_operands = 1 : i64, tpu.core_type = #tpu.core_type<tc>, window_params = [{transform_indices = @transform_0, window_bounds = array<i64: 1, 1, 22, 8>}, {pipeline_mode = #tpu.pipeline_mode<synchronous>, transform_indices = @transform_1, window_bounds = array<i64: 8, 32>}, {pipeline_mode = #tpu.pipeline_mode<synchronous>, transform_indices = @transform_2, window_bounds = array<i64: 224, 128>}, {transform_indices = @transform_3, window_bounds = array<i64: 1, 16, 128>}]} {
    %c0 = arith.constant 0 : index
    %c0_0 = arith.constant 0 : index
    %c0_1 = arith.constant 0 : index
    %c0_2 = arith.constant 0 : index
    %0 = vector.load %arg2[%c0, %c0_0, %c0_1, %c0_2] : memref<1x1x22x8xbf16, #tpu.memory_space<vmem>>, vector<1x1x22x8xbf16>
    %1 = vector.shape_cast %0 : vector<1x1x22x8xbf16> to vector<22x8xbf16>
    %c0_3 = arith.constant 0 : index
    %c0_4 = arith.constant 0 : index
    %2 = vector.load %arg3[%c0_3, %c0_4] : memref<8x32xbf16, #tpu.memory_space<vmem>>, vector<8x32xbf16>
    %cst = arith.constant dense<0.000000e+00> : vector<22x32xf32>
    %3 = tpu.matmul %1, %2, %cst {dimension_numbers = #tpu.dot_dimension_numbers<[1], [0], [0], [1], [0, 0, 1, 1], [], []>} : vector<22x8xbf16>, vector<8x32xbf16>, vector<22x32xf32> -> vector<22x32xf32>
    %cst_5 = arith.constant 0.000000e+00 : f32
    %4 = vector.broadcast %cst_5 : f32 to vector<22x32xf32>
    %5 = arith.maximumf %3, %4 : vector<22x32xf32>
    %c0_6 = arith.constant 0 : index
    %c0_7 = arith.constant 0 : index
    %6 = vector.load %arg6[%c0_6, %c0_7] : memref<22x32xf32, #tpu.memory_space<vmem>>, vector<22x32xf32>
    tpu.vector_store %arg6[%c0_6, %c0_7], %5 {strides = array<i32>} : memref<22x32xf32, #tpu.memory_space<vmem>>, vector<22x32xf32>,
    %c0_8 = arith.constant 0 : index
    %c0_9 = arith.constant 0 : index
    %7 = vector.load %arg6[%c0_8, %c0_9] : memref<22x32xf32, #tpu.memory_space<vmem>>, vector<16x32xf32>
    %8 = arith.truncf %7 : vector<16x32xf32> to vector<16x32xbf16>
    %c1 = arith.constant 1 : index
    %c0_10 = arith.constant 0 : index
    %9 = vector.load %arg6[%c1, %c0_10] : memref<22x32xf32, #tpu.memory_space<vmem>>, vector<16x32xf32>
    %10 = arith.truncf %9 : vector<16x32xf32> to vector<16x32xbf16>
    %c2 = arith.constant 2 : index
    %c0_11 = arith.constant 0 : index
    %11 = vector.load %arg6[%c2, %c0_11] : memref<22x32xf32, #tpu.memory_space<vmem>>, vector<16x32xf32>
    %12 = arith.truncf %11 : vector<16x32xf32> to vector<16x32xbf16>
    %c3 = arith.constant 3 : index
    %c0_12 = arith.constant 0 : index
    %13 = vector.load %arg6[%c3, %c0_12] : memref<22x32xf32, #tpu.memory_space<vmem>>, vector<16x32xf32>
    %14 = arith.truncf %13 : vector<16x32xf32> to vector<16x32xbf16>
    %c4 = arith.constant 4 : index
    %c0_13 = arith.constant 0 : index
    %15 = vector.load %arg6[%c4, %c0_13] : memref<22x32xf32, #tpu.memory_space<vmem>>, vector<16x32xf32>
    %16 = arith.truncf %15 : vector<16x32xf32> to vector<16x32xbf16>
    %c5 = arith.constant 5 : index
    %c0_14 = arith.constant 0 : index
    %17 = vector.load %arg6[%c5, %c0_14] : memref<22x32xf32, #tpu.memory_space<vmem>>, vector<16x32xf32>
    %18 = arith.truncf %17 : vector<16x32xf32> to vector<16x32xbf16>
    %c6 = arith.constant 6 : index
    %c0_15 = arith.constant 0 : index
    %19 = vector.load %arg6[%c6, %c0_15] : memref<22x32xf32, #tpu.memory_space<vmem>>, vector<16x32xf32>
    %20 = arith.truncf %19 : vector<16x32xf32> to vector<16x32xbf16>
    %21 = tpu.concatenate %8, %10, %12, %14, %16, %18, %20 in 1 : vector<16x32xbf16>, vector<16x32xbf16>, vector<16x32xbf16>, vector<16x32xbf16>, vector<16x32xbf16>, vector<16x32xbf16>, vector<16x32xbf16> -> vector<16x224xbf16>
    %c0_16 = arith.constant 0 : index
    %c0_17 = arith.constant 0 : index
    %22 = vector.load %arg4[%c0_16, %c0_17] : memref<224x128xbf16, #tpu.memory_space<vmem>>, vector<224x128xbf16>
    %cst_18 = arith.constant dense<0.000000e+00> : vector<16x128xf32>
    %23 = tpu.matmul %21, %22, %cst_18 {dimension_numbers = #tpu.dot_dimension_numbers<[1], [0], [0], [1], [0, 0, 1, 1], [], []>} : vector<16x224xbf16>, vector<224x128xbf16>, vector<16x128xf32> -> vector<16x128xf32>
    %cst_19 = arith.constant 0.000000e+00 : f32
    %24 = vector.broadcast %cst_19 : f32 to vector<16x128xf32>
    %25 = arith.maximumf %23, %24 : vector<16x128xf32>
    %c0_20 = arith.constant 0 : index
    %c0_21 = arith.constant 0 : index
    %c0_22 = arith.constant 0 : index
    %26 = vector.load %arg5[%c0_20, %c0_21, %c0_22] : memref<1x16x128xf32, #tpu.memory_space<vmem>>, vector<1x16x128xf32>
    %27 = vector.shape_cast %26 : vector<1x16x128xf32> to vector<16x128xf32>
    %28 = vector.shape_cast %25 : vector<16x128xf32> to vector<1x16x128xf32>
    tpu.vector_store %arg5[%c0_20, %c0_21, %c0_22], %28 {strides = array<i32>} : memref<1x16x128xf32, #tpu.memory_space<vmem>>, vector<1x16x128xf32>,
    return
  }
  func.func @transform_0(%arg0: i32, %arg1: i32) -> (i32, i32, i32, i32) {
    %c0_i32 = arith.constant 0 : i32
    %c0_i32_0 = arith.constant 0 : i32
    %c0_i32_1 = arith.constant 0 : i32
    return %arg0, %arg1, %c0_i32, %c0_i32_0 : i32, i32, i32, i32
  }
  func.func @transform_1(%arg0: i32, %arg1: i32) -> (i32, i32) {
    %c0_i32 = arith.constant 0 : i32
    %c0_i32_0 = arith.constant 0 : i32
    %c0_i32_1 = arith.constant 0 : i32
    return %c0_i32, %c0_i32_0 : i32, i32
  }
  func.func @transform_2(%arg0: i32, %arg1: i32) -> (i32, i32) {
    %c0_i32 = arith.constant 0 : i32
    %c0_i32_0 = arith.constant 0 : i32
    %c0_i32_1 = arith.constant 0 : i32
    return %c0_i32, %c0_i32_0 : i32, i32
  }
  func.func @transform_3(%arg0: i32, %arg1: i32) -> (i32, i32, i32) {
    %c0_i32 = arith.constant 0 : i32
    %c0_i32_0 = arith.constant 0 : i32
    return %arg0, %arg1, %c0_i32 : i32, i32, i32
  }
}

</mosaic_0001>

<llo_original>
// kernel: tpu_custom_call.1
$region0: #{tpu_custom_call.1}
  #allocation0 [shape = 'u32[]', space=smem, size = 0x4, offset = 0x4, fixed_abs, tag = 'smem constant byte address 0x4 - core index']
  #allocation1 [shape = 'u32[144,128]{1,0:T(1,128)}', space=vmem, size = 0x12000, scoped, tag = 'internal scratch']
  #allocation2 [shape = 'f32[22,32]{1,0:T(8,128)}', space=vmem, size = 0x3000, scoped, tag = 'scratch operand']
  %s0 = inlined_call_operand.vmem [shape: bf16[2,3,22,8], index: 0, kind: input, shape index: {}]
  %s1 = inlined_call_operand.vmem [shape: bf16[8,32], index: 1, kind: input, shape index: {}]
  %s2 = inlined_call_operand.hbm [shape: bf16[224,128], index: 2, kind: input, shape index: {}]
  %s3 = inlined_call_operand.hbm [shape: f32[2,48,128], index: 3, kind: output, shape index: {}]
  %s4 = sld [smem:[#allocation0]]
  $region49: #{tpu_custom_call.1} parent=0
    _
  %s6 = ssub.s32 1, %s4
  %s7 = scalar_select 0, %s6, %s4
  $region1: #{tpu_custom_call.1} parent=0
    #allocation3 [shape = 'u8[57344]{0}', space=vmem, size = 0xe000, scoped, tag = 'input window, operand 2, single buffered']
    #allocation4 [shape = 's32[2]{0}', space=sflag, size = 0x8, scoped, tag = 'scoped memory for tpu_custom_call.1']
    #allocation5 [shape = 's32[2]{0}', space=sflag, size = 0x8, scoped, tag = 'scoped memory for tpu_custom_call.1']
    #allocation6 [shape = 'u8[16384]{0}', space=vmem, size = 0x4000, scoped, tag = 'output window, operand 0']
    %8 = vsyncpa [#allocation4], 0
    %9 = vsyncpa [#allocation5], 0
    %s10 = scalar_lea.sflag [#allocation5], 1
    %11 = vsyncpa %s10, 0
    loop: start=0, step=1, limit=8
    $region2: #{tpu_custom_call.1} parent=1 // loop_pre_header
      _
    $region3: #{tpu_custom_call.1} parent=1 // loop_header
      %s13 = sphi 0, %s17
      %p14 = scmp.ge.s32.totalorder %s13, 8
      %s20 = sphi 0, %s32
      %s21 = sphi 0, %s28
      %s22 = sphi 0, %s20
      %s23 = sphi 0, %s21
      %s24 = sphi 0, %s22
      %s25 = sphi 0, %s23
      %s37 = sphi 0, %s39
      %s40 = sphi 0, %s37
      %s41 = sphi 0, %s40
      %s57 = sphi 0, %s41
      %s61 = sphi 0, %s61
      %s63 = sphi 0, %s61
      %s64 = sphi 0, %s63
      %s78 = sphi 0, %s64
      %s82 = sphi 0, %s82
      %s84 = sphi 0, %s82
      %s85 = sphi 0, %s84
      %s99 = sphi 0, %s85
      %s107 = sphi 0, %s109
      %s110 = sphi 0, %s107
      %s111 = sphi 0, %s110
      %s127 = sphi 0, %s111
    $region4: #{tpu_custom_call.1} parent=1 // loop_header_branch
      %16 = sbr.rel (%p14) target = $region8
    $region5: #{tpu_custom_call.1} parent=1 // loop_body
      %s18 = ssub.s32 %s13, 1
      %s19 = ssub.s32 %s13, 2
      %s26 = sadd.s32 1, %s21
      %p27 = scmp.ge.s32.totalorder %s26, 3
      %s28 = scalar_select %p27, 0, %s26
      %s29 = sadd.s32 1, %s20
      %s30 = scalar_select %p27, %s29, %s20
      %p31 = scmp.ge.s32.totalorder %s30, 2
      %s32 = scalar_select %p31, 0, %s30
      %s33 = ssub.s32 %s20, %s32
      %s34 = ssub.s32 %s21, %s28
      %s35 = sor.u32 %s33, %s34
      %p36 = scmp.eq.s32.totalorder %s35, 0
      %s38 = sadd.s32 %s37, 1
      %s39 = scalar_select %p36, %s37, %s38
      %p42 = pneg %p36
      %p43 = scmp.eq.s32.totalorder %s13, 5
      %p44 = por %p42, %p43
      %p45 = scmp.ne.s32.totalorder %s37, %s40
      %p46 = scmp.eq.s32.totalorder %s13, 0
      %p47 = por %p45, %p46
      %p48 = scmp.ne.s32.totalorder %s37, %s40
      %p49 = scmp.eq.s32.totalorder %s18, 5
      %p50 = por %p48, %p49
      %p51 = scmp.ne.s32.totalorder %s40, %s41
      %p52 = scmp.eq.s32.totalorder %s18, 0
      %p53 = por %p51, %p52
      %p54 = scmp.ne.s32.totalorder %s40, %s41
      %p55 = scmp.eq.s32.totalorder %s19, 5
      %p56 = por %p54, %p55
      %p58 = scmp.ne.s32.totalorder %s41, %s57
      %p59 = scmp.eq.s32.totalorder %s19, 0
      %p60 = por %p58, %p59
      %s62 = sadd.s32 %s61, 1
      %p65 = scmp.eq.s32.totalorder %s13, 5
      %p66 = scmp.ne.s32.totalorder %s61, %s63
      %p67 = scmp.eq.s32.totalorder %s13, 0
      %p68 = por %p66, %p67
      %p69 = scmp.ne.s32.totalorder %s61, %s63
      %p70 = scmp.eq.s32.totalorder %s18, 5
      %p71 = por %p69, %p70
      %p72 = scmp.ne.s32.totalorder %s63, %s64
      %p73 = scmp.eq.s32.totalorder %s18, 0
      %p74 = por %p72, %p73
      %p75 = scmp.ne.s32.totalorder %s63, %s64
      %p76 = scmp.eq.s32.totalorder %s19, 5
      %p77 = por %p75, %p76
      %p79 = scmp.ne.s32.totalorder %s64, %s78
      %p80 = scmp.eq.s32.totalorder %s19, 0
      %p81 = por %p79, %p80
      %s83 = sadd.s32 %s82, 1
      %p86 = scmp.eq.s32.totalorder %s13, 5
      %p87 = scmp.ne.s32.totalorder %s82, %s84
      %p88 = scmp.eq.s32.totalorder %s13, 0
      %p89 = por %p87, %p88
      %p90 = scmp.ne.s32.totalorder %s82, %s84
      %p91 = scmp.eq.s32.totalorder %s18, 5
      %p92 = por %p90, %p91
      %p93 = scmp.ne.s32.totalorder %s84, %s85
      %p94 = scmp.eq.s32.totalorder %s18, 0
      %p95 = por %p93, %p94
      %p96 = scmp.ne.s32.totalorder %s84, %s85
      %p97 = scmp.eq.s32.totalorder %s19, 5
      %p98 = por %p96, %p97
      %p100 = scmp.ne.s32.totalorder %s85, %s99
      %p101 = scmp.eq.s32.totalorder %s19, 0
      %p102 = por %p100, %p101
      %s103 = ssub.s32 %s20, %s32
      %s104 = ssub.s32 %s21, %s28
      %s105 = sor.u32 %s103, %s104
      %p106 = scmp.eq.s32.totalorder %s105, 0
      %s108 = sadd.s32 %s107, 1
      %s109 = scalar_select %p106, %s107, %s108
      %p112 = pneg %p106
      %p113 = scmp.eq.s32.totalorder %s13, 5
      %p114 = por %p112, %p113
      %p115 = scmp.ne.s32.totalorder %s107, %s110
      %p116 = scmp.eq.s32.totalorder %s13, 0
      %p117 = por %p115, %p116
      %p118 = scmp.ne.s32.totalorder %s107, %s110
      %p119 = scmp.eq.s32.totalorder %s18, 5
      %p120 = por %p118, %p119
      %p121 = scmp.ne.s32.totalorder %s110, %s111
      %p122 = scmp.eq.s32.totalorder %s18, 0
      %p123 = por %p121, %p122
      %p124 = scmp.ne.s32.totalorder %s110, %s111
      %p125 = scmp.eq.s32.totalorder %s19, 5
      %p126 = por %p124, %p125
      %p128 = scmp.ne.s32.totalorder %s111, %s127
      %p129 = scmp.eq.s32.totalorder %s19, 0
      %p130 = por %p128, %p129
      %p131 = scmp.le.s32.totalorder 1, %s13
      %p132 = scmp.lt.s32.totalorder %s13, 7
      %p133 = pnand %p131, %p132
      %p134 = pneg %p133
      // Predicated region
      $region9: #{tpu_custom_call.1} parent=5 // pred_check
        _
      $region10: #{tpu_custom_call.1} parent=5 // pred_check_branch
        %136 = sbr.rel (%p133) target = $region12
      $region11: #{tpu_custom_call.1} parent=5 // pred_region
        %s137 = ssub.s32 %s13, 1
        // Predicated region
        $region13: #{tpu_custom_call.1} parent=11 // pred_check
          %p138 = pneg %p74
        $region14: #{tpu_custom_call.1} parent=11 // pred_check_branch
          %140 = sbr.rel (%p138) target = $region16
        $region15: #{tpu_custom_call.1} parent=11 // pred_region
          _
        $region16: #{tpu_custom_call.1} parent=11 // pred_fallthru
          _
        // Predicated region
        $region17: #{tpu_custom_call.1} parent=11 // pred_check
          %p141 = pneg %p95
        $region18: #{tpu_custom_call.1} parent=11 // pred_check_branch
          %143 = sbr.rel (%p141) target = $region20
        $region19: #{tpu_custom_call.1} parent=11 // pred_region
          %s145 = ssub.s32 1792, 1792
          %146 = vsyncadd [#allocation4], %s145
          %s147 = sshll.u32 [#allocation3], 4
          %s148 = int_to_ptr.vmem [resolvable:$true] %s147
          %153 = dma.hbm_to_vmem [thread:$0]  %s2, 1792, %s148, [#allocation4], 64, 64, 4
        $region20: #{tpu_custom_call.1} parent=11 // pred_fallthru
          _
      $region12: #{tpu_custom_call.1} parent=5 // pred_fallthru
        _
      %p154 = scmp.lt.s32.totalorder %s13, 6
      // Predicated region
      $region21: #{tpu_custom_call.1} parent=5 // pred_check
        %p155 = pneg %p154
      $region22: #{tpu_custom_call.1} parent=5 // pred_check_branch
        %157 = sbr.rel (%p155) target = $region24
      $region23: #{tpu_custom_call.1} parent=5 // pred_region
        // Predicated region
        $region25: #{tpu_custom_call.1} parent=23 // pred_check
          %p158 = pneg %p47
        $region26: #{tpu_custom_call.1} parent=23 // pred_check_branch
          %160 = sbr.rel (%p158) target = $region28
        $region27: #{tpu_custom_call.1} parent=23 // pred_region
          %p161 = scmp.lt.s32.totalorder %s20, 1
          %s162 = scalar_select %p161, %s20, 1
          %p163 = scmp.lt.s32.totalorder %s21, 2
          %s164 = scalar_select %p163, %s21, 2
          %s165 = smul.addr %s164, 3
          %s166 = smul.addr %s162, 9
          %s167 = sadd.s32 %s165, %s166
          %s168 = smul.addr %s167, 4
          %s169 = scalar_lea.vmem %s0, %s168
        $region28: #{tpu_custom_call.1} parent=23 // pred_fallthru
          _
      $region24: #{tpu_custom_call.1} parent=5 // pred_fallthru
        _
      %p170 = scmp.le.s32.totalorder 1, %s13
      %p171 = scmp.lt.s32.totalorder %s13, 7
      %p172 = pnand %p170, %p171
      %p173 = pneg %p172
      // Predicated region
      $region29: #{tpu_custom_call.1} parent=5 // pred_check
        _
      $region30: #{tpu_custom_call.1} parent=5 // pred_check_branch
        %175 = sbr.rel (%p172) target = $region32
      $region31: #{tpu_custom_call.1} parent=5 // pred_region
        %s176 = ssub.s32 %s13, 1
        // Predicated region
        $region33: #{tpu_custom_call.1} parent=31 // pred_check
          %p177 = pneg %p95
        $region34: #{tpu_custom_call.1} parent=31 // pred_check_branch
          %179 = sbr.rel (%p177) target = $region36
        $region35: #{tpu_custom_call.1} parent=31 // pred_region
          %180 = dma.done [#allocation4], 1792
        $region36: #{tpu_custom_call.1} parent=31 // pred_fallthru
          _
        %p181 = scmp.lt.s32.totalorder %s22, 1
        %s182 = scalar_select %p181, %s22, 1
        %p183 = scmp.lt.s32.totalorder %s23, 2
        %s184 = scalar_select %p183, %s23, 2
        %s185 = smul.addr %s184, 3
        %s186 = smul.addr %s182, 9
        %s187 = sadd.s32 %s185, %s186
        %s188 = smul.addr %s187, 4
        %s189 = scalar_lea.vmem %s0, %s188
        %p190 = pneg %p53
        %p191 = pneg %p50
        %p192 = pneg %p74
        %p193 = pneg %p71
        %p194 = pneg %p95
        %p195 = pneg %p92
        %p196 = pneg %p123
        %p197 = pneg %p120
        %s198 = sand.u32 %s110, 1
        %s199 = scalar_lea.sflag [#allocation5], %s198
        %s200 = sand.u32 %s110, 1
        %s201 = smul.addr %s200, 16
        %s202 = scalar_lea.vmem [#allocation6], %s201
        %p203 = scmp.lt.s32.totalorder %s22, 1
        %s204 = scalar_select %p203, %s22, 1
        %p205 = scmp.lt.s32.totalorder %s23, 2
        %s206 = scalar_select %p205, %s23, 2
        %s207 = smul.addr %s206, 3
        %s208 = smul.addr %s204, 9
        %s209 = sadd.s32 %s207, %s208
        %s210 = smul.addr %s209, 4
        %s211 = scalar_lea.vmem %s0, %s210
        %s212 = smul.u32 2, %s23
        %v214 = vld [vmem:[%s211] sm:$0xf]
        %v215 = vld [vmem:[%s211 + $0x4] sm:$0xf]
        %v216 = vld [vmem:[%s211 + $0x8] sm:$0x7]
        %v217 = vld [vmem:[%s1] sm:$0xf]
        %v221 = vunpack.c.l.b16 %v214
        %v222 = vunpack.c.l.b16 %v215
        %v223 = vunpack.c.l.b16 %v216
        %v224 = vpack.c.b16 %v222, %v221
        %v225 = vpack.c.b16 %v223, %v223
        %vm226 = vcmask 64512
        %v228 = vsel %vm226, %v224, 0
        %v231 = vsel %vm226, %v225, 0
        %vm233 = vcmask 1043456
        %v235 = vsel %vm233, %v217, 0
        %237 = vmatprep.subr.bf16.mxu0 0
        %238 = vmatpush1.bf16.msra.mxu0 %v235
        %239 = vmatprep.subr.bf16.mxu0 0
        %240 = vmatpush1.bf16.msra.mxu0 0
        %241 = vmatprep.subr.bf16.mxu0 0
        %242 = vmatpush1.bf16.msra.mxu0 0
        %243 = vmatprep.subr.bf16.mxu0 0
        %244 = vmatpush1.bf16.msra.mxu0 0
        %245 = vmatprep.subr.bf16.mxu0 0
        %246 = vmatpush1.bf16.msra.mxu0 0
        %247 = vmatprep.subr.bf16.mxu0 0
        %248 = vmatpush1.bf16.msra.mxu0 0
        %249 = vmatprep.subr.bf16.mxu0 0
        %250 = vmatpush1.bf16.msra.mxu0 0
        %251 = vmatprep.subr.bf16.mxu0 0
        %252 = vmatpush1.bf16.msra.mxu0 0
        %253 = vmatprep.subr.bf16.mxu0 0
        %254 = vmatpush1.bf16.msra.mxu0 0
        %255 = vmatprep.subr.bf16.mxu0 0
        %256 = vmatpush1.bf16.msra.mxu0 0
        %257 = vmatprep.subr.bf16.mxu0 0
        %258 = vmatpush1.bf16.msra.mxu0 0
        %259 = vmatprep.subr.bf16.mxu0 0
        %260 = vmatpush1.bf16.msra.mxu0 0
        %261 = vmatprep.subr.bf16.mxu0 0
        %262 = vmatpush1.bf16.msra.mxu0 0
        %263 = vmatprep.subr.bf16.mxu0 0
        %264 = vmatpush1.bf16.msra.mxu0 0
        %265 = vmatprep.subr.bf16.mxu0 0
        %266 = vmatpush1.bf16.msra.mxu0 0
        %267 = vmatprep.subr.bf16.mxu0 0
        %268 = vmatpush1.bf16.msra.mxu0 0
        %269 = vmatprep.mubr.bf16.mxu0 0
        %270 = vmatmul.mubr.bf16.gmra.mrb[0].mxu0 %v228
        %v271 = vpop.f32.mrb[0].mxu0
        %v272 = vadd.f32 0.0, %v271
        %v273 = vpop.f32.mrb[0].mxu0
        %v274 = vpop.f32.mrb[0].mxu0
        %v275 = vadd.f32 0.0, %v274
        %v276 = vpop.f32.mrb[0].mxu0
        %277 = vmatprep.mubr.bf16.mxu0 0
        %278 = vmatmul.mubr.bf16.gmra.mrb[0].mxu0 %v231
        %v279 = vpop.f32.mrb[0].mxu0
        %v280 = vadd.f32 0.0, %v279
        %v281 = vpop.f32.mrb[0].mxu0
        %v282 = vpop.f32.mrb[0].mxu0
        %v283 = vpop.f32.mrb[0].mxu0
        %284 = vdwg.mxu0
        %v285 = vmax.f32 %v272, 0.0
        %v286 = vmax.f32 %v275, 0.0
        %v287 = vmax.f32 %v280, 0.0
        %vm288 = vcmask 261120
        %289 = vst.msk [vmem:[#allocation2] sm:$0xff] %vm288, %v285
        %290 = vst.msk [vmem:[#allocation2 + $0x8] sm:$0xff] %vm288, %v286
        %vm291 = vcmask 259072
        %292 = vst.msk [vmem:[#allocation2 + $0x10] sm:$0x3f] %vm291, %v287
        %v293 = vld [vmem:[#allocation2] sm:$0xff]
        %v294 = vld [vmem:[#allocation2 + $0x8] sm:$0xff]
        %v295 = vpack.c.bf16 %v294, %v293
        %v296 = vld [vmem:[#allocation2 + $0x1] sm:$0xff]
        %v297 = vld [vmem:[#allocation2 + $0x9] sm:$0xff]
        %v298 = vpack.c.bf16 %v297, %v296
        %v299 = vld [vmem:[#allocation2 + $0x2] sm:$0xff]
        %v300 = vld [vmem:[#allocation2 + $0xa] sm:$0xff]
        %v301 = vpack.c.bf16 %v300, %v299
        %v302 = vld [vmem:[#allocation2 + $0x3] sm:$0xff]
        %v303 = vld [vmem:[#allocation2 + $0xb] sm:$0xff]
        %v304 = vpack.c.bf16 %v303, %v302
        %v305 = vld [vmem:[#allocation2 + $0x4] sm:$0xff]
        %v306 = vld [vmem:[#allocation2 + $0xc] sm:$0xff]
        %v307 = vpack.c.bf16 %v306, %v305
        %v308 = vld [vmem:[#allocation2 + $0x5] sm:$0xff]
        %v309 = vld [vmem:[#allocation2 + $0xd] sm:$0xff]
        %v310 = vpack.c.bf16 %v309, %v308
        %v311 = vld [vmem:[#allocation2 + $0x6] sm:$0xff]
        %v312 = vld [vmem:[#allocation2 + $0xe] sm:$0xff]
        %v313 = vpack.c.bf16 %v312, %v311
        %315 = vrot.lane.b32.xlu0 %v298, 32
        %v316 = vpop.permute.xlu0 %315
        %318 = vrot.lane.b32.xlu0 %v301, 64
        %v319 = vpop.permute.xlu0 %318
        %321 = vrot.lane.b32.xlu0 %v304, 96
        %v322 = vpop.permute.xlu0 %321
        %324 = vrot.lane.b32.xlu0 %v310, 32
        %v325 = vpop.permute.xlu0 %324
        %327 = vrot.lane.b32.xlu0 %v313, 64
        %v328 = vpop.permute.xlu0 %327
        %v331 = vsel %vm288, %v295, %v316
        %vm332 = vcmask 523264
        %v334 = vsel %vm332, %v331, %v319
        %vm335 = vcmask 785408
        %v337 = vsel %vm335, %v334, %v322
        %v341 = vsel %vm288, %v307, %v325
        %v343 = vsel %vm332, %v341, %v328
        %v344 = vld [vmem:[#allocation3] sm:$0xf]
        %v345 = vld [vmem:[#allocation3 + $0x4] sm:$0xf]
        %v346 = vld [vmem:[#allocation3 + $0x8] sm:$0xf]
        %v347 = vld [vmem:[#allocation3 + $0xc] sm:$0xf]
        %v348 = vld [vmem:[#allocation3 + $0x10] sm:$0xf]
        %v349 = vld [vmem:[#allocation3 + $0x14] sm:$0xf]
        %v350 = vld [vmem:[#allocation3 + $0x18] sm:$0xf]
        %v351 = vld [vmem:[#allocation3 + $0x1c] sm:$0xf]
        %v352 = vld [vmem:[#allocation3 + $0x20] sm:$0xf]
        %v353 = vld [vmem:[#allocation3 + $0x24] sm:$0xf]
        %v354 = vld [vmem:[#allocation3 + $0x28] sm:$0xf]
        %v355 = vld [vmem:[#allocation3 + $0x2c] sm:$0xf]
        %v356 = vld [vmem:[#allocation3 + $0x30] sm:$0xf]
        %v357 = vld [vmem:[#allocation3 + $0x34] sm:$0xf]
        %v358 = vld [vmem:[#allocation3 + $0x38] sm:$0xf]
        %v359 = vld [vmem:[#allocation3 + $0x3c] sm:$0xf]
        %v360 = vld [vmem:[#allocation3 + $0x40] sm:$0xf]
        %v361 = vld [vmem:[#allocation3 + $0x44] sm:$0xf]
        %v362 = vld [vmem:[#allocation3 + $0x48] sm:$0xf]
        %v363 = vld [vmem:[#allocation3 + $0x4c] sm:$0xf]
        %v364 = vld [vmem:[#allocation3 + $0x50] sm:$0xf]
        %v365 = vld [vmem:[#allocation3 + $0x54] sm:$0xf]
        %v366 = vld [vmem:[#allocation3 + $0x58] sm:$0xf]
        %v367 = vld [vmem:[#allocation3 + $0x5c] sm:$0xf]
        %v368 = vld [vmem:[#allocation3 + $0x60] sm:$0xf]
        %v369 = vld [vmem:[#allocation3 + $0x64] sm:$0xf]
        %v370 = vld [vmem:[#allocation3 + $0x68] sm:$0xf]
        %v371 = vld [vmem:[#allocation3 + $0x6c] sm:$0xf]
        %v400 = vunpack.c.l.b16 %v344
        %v401 = vunpack.c.l.b16 %v345
        %v402 = vunpack.c.l.b16 %v346
        %v403 = vunpack.c.l.b16 %v347
        %v404 = vunpack.c.l.b16 %v348
        %v405 = vunpack.c.l.b16 %v349
        %v406 = vunpack.c.l.b16 %v350
        %v407 = vunpack.c.l.b16 %v351
        %v408 = vunpack.c.l.b16 %v352
        %v409 = vunpack.c.l.b16 %v353
        %v410 = vunpack.c.l.b16 %v354
        %v411 = vunpack.c.l.b16 %v355
        %v412 = vunpack.c.l.b16 %v356
        %v413 = vunpack.c.l.b16 %v357
        %v414 = vunpack.c.l.b16 %v358
        %v415 = vunpack.c.l.b16 %v359
        %v416 = vunpack.c.l.b16 %v360
        %v417 = vunpack.c.l.b16 %v361
        %v418 = vunpack.c.l.b16 %v362
        %v419 = vunpack.c.l.b16 %v363
        %v420 = vunpack.c.l.b16 %v364
        %v421 = vunpack.c.l.b16 %v365
        %v422 = vunpack.c.l.b16 %v366
        %v423 = vunpack.c.l.b16 %v367
        %v424 = vunpack.c.l.b16 %v368
        %v425 = vunpack.c.l.b16 %v369
        %v426 = vunpack.c.l.b16 %v370
        %v427 = vunpack.c.l.b16 %v371
        %v428 = vpack.c.b16 %v401, %v400
        %v429 = vpack.c.b16 %v403, %v402
        %v430 = vpack.c.b16 %v405, %v404
        %v431 = vpack.c.b16 %v407, %v406
        %v432 = vpack.c.b16 %v409, %v408
        %v433 = vpack.c.b16 %v411, %v410
        %v434 = vpack.c.b16 %v413, %v412
        %v435 = vpack.c.b16 %v415, %v414
        %v436 = vpack.c.b16 %v417, %v416
        %v437 = vpack.c.b16 %v419, %v418
        %v438 = vpack.c.b16 %v421, %v420
        %v439 = vpack.c.b16 %v423, %v422
        %v440 = vpack.c.b16 %v425, %v424
        %v441 = vpack.c.b16 %v427, %v426
        %v456 = vsel %vm335, %v343, 0
        %458 = vmatprep.subr.bf16.mxu0 0
        %459 = vmatpush1.bf16.msra.mxu0 %v428
        %460 = vmatprep.subr.bf16.mxu0 0
        %461 = vmatpush1.bf16.msra.mxu0 %v429
        %462 = vmatprep.subr.bf16.mxu0 0
        %463 = vmatpush1.bf16.msra.mxu0 %v430
        %464 = vmatprep.subr.bf16.mxu0 0
        %465 = vmatpush1.bf16.msra.mxu0 %v431
        %466 = vmatprep.subr.bf16.mxu0 0
        %467 = vmatpush1.bf16.msra.mxu0 %v432
        %468 = vmatprep.subr.bf16.mxu0 0
        %469 = vmatpush1.bf16.msra.mxu0 %v433
        %470 = vmatprep.subr.bf16.mxu0 0
        %471 = vmatpush1.bf16.msra.mxu0 %v434
        %472 = vmatprep.subr.bf16.mxu0 0
        %473 = vmatpush1.bf16.msra.mxu0 %v435
        %474 = vmatprep.subr.bf16.mxu0 0
        %475 = vmatpush1.bf16.msra.mxu0 %v436
        %476 = vmatprep.subr.bf16.mxu0 0
        %477 = vmatpush1.bf16.msra.mxu0 %v437
        %478 = vmatprep.subr.bf16.mxu0 0
        %479 = vmatpush1.bf16.msra.mxu0 %v438
        %480 = vmatprep.subr.bf16.mxu0 0
        %481 = vmatpush1.bf16.msra.mxu0 %v439
        %482 = vmatprep.subr.bf16.mxu0 0
        %483 = vmatpush1.bf16.msra.mxu0 %v440
        %484 = vmatprep.subr.bf16.mxu0 0
        %485 = vmatpush1.bf16.msra.mxu0 %v441
        %486 = vmatprep.subr.bf16.mxu0 0
        %487 = vmatpush1.bf16.msra.mxu0 0
        %488 = vmatprep.subr.bf16.mxu0 0
        %489 = vmatpush1.bf16.msra.mxu0 0
        %490 = vmatprep.mubr.bf16.mxu0 %v456
        %491 = vmatmul.mubr.bf16.gmra.mrb[0].mxu0 %v337
        %v492 = vpop.f32.mrb[0].mxu0
        %v493 = vadd.f32 0.0, %v492
        %v494 = vpop.f32.mrb[0].mxu0
        %v495 = vpop.f32.mrb[0].mxu0
        %v496 = vadd.f32 0.0, %v495
        %v497 = vpop.f32.mrb[0].mxu0
        %498 = vdwg.mxu0
        %v499 = vmax.f32 %v493, 0.0
        %v500 = vmax.f32 %v496, 0.0
        %501 = vst [vmem:[%s202] sm:$0xff] %v499
        %502 = vst [vmem:[%s202 + $0x8] sm:$0xff] %v500
        %s503 = sand.u32 %s110, 1
        %s504 = scalar_lea.sflag [#allocation5], %s503
        %s505 = sand.u32 %s110, 1
        %s506 = smul.addr %s505, 16
        %s507 = scalar_lea.vmem [#allocation6], %s506
        // Predicated region
        $region37: #{tpu_custom_call.1} parent=31 // pred_check
          %p508 = pneg %p120
        $region38: #{tpu_custom_call.1} parent=31 // pred_check_branch
          %510 = sbr.rel (%p508) target = $region40
        $region39: #{tpu_custom_call.1} parent=31 // pred_region
          %s511 = smul.u32 2, %s23
          %s513 = ssub.s32 256, 256
          %514 = vsyncadd %s504, %s513
          %s515 = smul.addr %s22, 6
          %s516 = sadd.s32 %s511, %s515
          %s517 = smul.addr %s516, 128
          %s518 = scalar_lea.hbm %s3, %s517
          %s519 = sshll.u32 %s507, 4
          %s520 = int_to_ptr.vmem [resolvable:$true] %s519
          %525 = dma.vmem_to_hbm [thread:$0]  %s520, 256, %s518, %s504, 128, 128, 8
        $region40: #{tpu_custom_call.1} parent=31 // pred_fallthru
          _
      $region32: #{tpu_custom_call.1} parent=5 // pred_fallthru
        _
      %p526 = scmp.le.s32.totalorder 2, %s13
      // Predicated region
      $region41: #{tpu_custom_call.1} parent=5 // pred_check
        %p527 = pneg %p526
      $region42: #{tpu_custom_call.1} parent=5 // pred_check_branch
        %529 = sbr.rel (%p527) target = $region44
      $region43: #{tpu_custom_call.1} parent=5 // pred_region
        %s530 = ssub.s32 %s13, 2
        // Predicated region
        $region45: #{tpu_custom_call.1} parent=43 // pred_check
          %p531 = pneg %p126
        $region46: #{tpu_custom_call.1} parent=43 // pred_check_branch
          %533 = sbr.rel (%p531) target = $region48
        $region47: #{tpu_custom_call.1} parent=43 // pred_region
          %s534 = sand.u32 %s111, 1
          %s535 = scalar_lea.sflag [#allocation5], %s534
          %s536 = sand.u32 %s111, 1
          %s537 = smul.addr %s536, 16
          %s538 = scalar_lea.vmem [#allocation6], %s537
          %539 = dma.done %s535, 256
        $region48: #{tpu_custom_call.1} parent=43 // pred_fallthru
          _
      $region44: #{tpu_custom_call.1} parent=5 // pred_fallthru
        _
    $region6: #{tpu_custom_call.1} parent=1 // loop_footer
      %s17 = sadd.s32 1, %s13
    $region7: #{tpu_custom_call.1} parent=1 // loop_footer_branch
      %12 = sbr.rel target = $region3
    $region8: #{tpu_custom_call.1} parent=1 // loop_exit
      _
    %540 = vsyncpa [#allocation4], 1
    %s541 = scalar_lea.sflag [#allocation4], 1
    %542 = vsyncpa %s541, 1
    %543 = vsyncpa [#allocation5], 1
    %s544 = scalar_lea.sflag [#allocation5], 1
    %545 = vsyncpa %s544, 1

</llo_original>
